<compile_context>
chip_gen: v7x
topology: tpu7x:2x2x1
jax: 0.10.0
libtpu: 0.0.40
codegen_flags: <defaults>
</compile_context>

<pallas_src>
import functools

import jax
import jax.numpy as jnp
from jax import lax
from jax.experimental import pallas as pl
from jax.experimental.pallas import tpu as pltpu


def _round_up(v, m):
    return ((v + m - 1) // m) * m


def _default_row_chunk():
    # 256 on v6e/v7x (256-wide MXU), 128 on v5e (4x128x128 MXU, smaller live set).
    try:
        kind = jax.devices()[0].device_kind.lower()
    except Exception:
        return 256
    if "v5 lite" in kind or "v5e" in kind or "v5litepod" in kind:
        return 128
    return 256


def _pinn_mlp_kernel(coords_ref, w0t_ref, b0_ref, *rest,
                     n_hidden_layers, row_chunk):
    # coords_ref: (N_INPUT=4, TM)            lane axis = batch rows
    # w0t_ref:    (H, 4),   b0_ref:  (H, 1)
    # wht_ref:    (L-1, H, H), bht_ref: (L-1, H, 1)   (only if L-1 > 0)
    # wet_ref:    (N_OUTPUT, H), bet_ref: (N_OUTPUT, 1)
    # out_ref:    (N_OUTPUT, TM)
    if n_hidden_layers > 0:
        wht_ref, bht_ref, wet_ref, bet_ref, out_ref = rest
    else:
        wet_ref, bet_ref, out_ref = rest

    tile_m = out_ref.shape[1]
    n_chunks = tile_m // row_chunk
    n_in = coords_ref.shape[0]

    # Hoist loop-invariant weight/bias loads out of the (unrolled) row loop.
    w0_cols = [w0t_ref[:, j:j + 1] for j in range(n_in)]    # each (H, 1)
    b0 = b0_ref[...]                                         # (H, 1)
    whs = [wht_ref[l] for l in range(n_hidden_layers)]       # each (H, H)
    bhs = [bht_ref[l] for l in range(n_hidden_layers)]       # each (H, 1)
    wet = wet_ref[...]                                        # (n_out, H)
    bet = bet_ref[...]                                        # (n_out, 1)

    def body(c, carry):
        r0 = pl.multiple_of(c * row_chunk, row_chunk)
        rows = pl.ds(r0, row_chunk)
        crd = coords_ref[:, rows]                             # (4, row_chunk)

        # Layer 0 fused with the coordinate concat: outer-product broadcast
        # FMAs on the VPU (lane axis = batch rows); no K=4 MXU matmul.
        acc = b0 + w0_cols[0] * crd[0:1, :]
        for j in range(1, n_in):
            acc = acc + w0_cols[j] * crd[j:j + 1, :]
        h = jnp.tanh(acc)                                     # (H, row_chunk)

        # Hidden Linear+Tanh blocks, lane-dense activations (H, row_chunk).
        for l in range(n_hidden_layers):
            h = jnp.tanh(
                jnp.dot(whs[l], h, preferred_element_type=jnp.float32)
                + bhs[l])

        # Output layer; lane-dense store (rows on the lane axis).
        out_ref[:, rows] = (
            jnp.dot(wet, h, preferred_element_type=jnp.float32) + bet
        ).astype(out_ref.dtype)
        return carry

    # Bounded unroll: enough scheduler visibility, no vreg-spill blowup.
    unroll = n_chunks if n_chunks <= 8 else 4
    lax.fori_loop(0, n_chunks, body, 0, unroll=unroll)


def pinn_forward(x, y, z, t, params, *, tile_m=8192, row_chunk=None):
    """PINN.forward: fused coordinate concat + FCN MLP via one Pallas kernel."""
    w0, b0, wh, bh, we, be = params
    n = x.shape[0]
    n_in = w0.shape[0]
    hdim = w0.shape[1]
    n_out = we.shape[1]
    n_hidden_layers = int(wh.shape[0])

    if row_chunk is None:
        row_chunk = _default_row_chunk()
    # Rows live on the lane axis -> row_chunk must be a multiple of 128.
    row_chunk = max(128, _round_up(min(row_chunk, max(tile_m, 128)), 128))
    # Tile: >= 2 grid steps when possible (megacore / v7x 2 TCs) and a
    # multiple of row_chunk; large tiles amortize the ~0.35us per-step cost.
    tm = min(_round_up(tile_m, row_chunk),
             max(row_chunk, _round_up(pl.cdiv(n, 2), row_chunk)))
    n_pad = _round_up(n, tm)
    grid = (n_pad // tm,)

    # Pack the 4 coordinates into one lane-dense (4, n_pad) f32 array.
    coords = jnp.stack(
        [jnp.reshape(a, (-1,)).astype(jnp.float32) for a in (x, y, z, t)],
        axis=0)
    if n_pad != n:
        coords = jnp.pad(coords, ((0, 0), (0, n_pad - n)))

    # Transposed (lane = batch) weight layout: h_new = W^T @ h + b^T.
    w0t = jnp.transpose(w0)                                   # (H, 4)
    b0t = jnp.transpose(b0)                                   # (H, 1)
    wet = jnp.transpose(we)                                    # (n_out, H)
    bet = jnp.transpose(be)                                    # (n_out, 1)

    const2 = lambda i: (0, 0)
    const3 = lambda i: (0, 0, 0)

    in_specs = [pl.BlockSpec((n_in, tm), lambda i: (0, i)),    # coords
                pl.BlockSpec((hdim, n_in), const2),            # W0^T
                pl.BlockSpec((hdim, 1), const2)]               # b0^T
    operands = [coords, w0t, b0t]
    if n_hidden_layers > 0:                                    # guard L-1 == 0
        wht = jnp.transpose(wh, (0, 2, 1))                     # (L-1, H, H)
        bht = jnp.transpose(bh, (0, 2, 1))                     # (L-1, H, 1)
        in_specs += [pl.BlockSpec((n_hidden_layers, hdim, hdim), const3),
                     pl.BlockSpec((n_hidden_layers, hdim, 1), const3)]
        operands += [wht, bht]
    in_specs += [pl.BlockSpec((n_out, hdim), const2),          # We^T
                 pl.BlockSpec((n_out, 1), const2)]             # be^T
    operands += [wet, bet]

    # Advisory cost hint for XLA's scheduler around the custom call.
    flops = 2 * n * (n_in * hdim + n_hidden_layers * hdim * hdim + hdim * n_out)
    transcendentals = n * hdim * (n_hidden_layers + 1)
    weight_bytes = 4 * sum(int(a.size) for a in (w0, b0, wh, bh, we, be))
    bytes_accessed = 4 * n_pad * (n_in + n_out) + weight_bytes

    kernel = functools.partial(_pinn_mlp_kernel,
                               n_hidden_layers=n_hidden_layers,
                               row_chunk=row_chunk)

    out = pl.pallas_call(
        kernel,
        out_shape=jax.ShapeDtypeStruct((n_out, n_pad), jnp.float32),
        grid=grid,
        in_specs=in_specs,
        out_specs=pl.BlockSpec((n_out, tm), lambda i: (0, i)),
        compiler_params=pltpu.CompilerParams(
            dimension_semantics=("parallel",)),
        cost_estimate=pl.CostEstimate(
            flops=flops,
            transcendentals=transcendentals,
            bytes_accessed=bytes_accessed),
    )(*operands)
    # Back to the PyTorch layout (N, N_OUTPUT); padded tail rows are dropped.
    return jnp.transpose(out[:, :n])


def init_params(key, n_input, n_output, n_hidden, n_layers):
    """Deterministic init mimicking nn.Linear's U(-1/sqrt(fan_in), 1/sqrt(fan_in))."""
    keys = jax.random.split(key, 2 * (n_layers + 1))

    def lin(kw, kb, fan_in, fan_out):
        bound = 1.0 / jnp.sqrt(jnp.float32(fan_in))
        w = jax.random.uniform(kw, (fan_in, fan_out), jnp.float32, -bound, bound)
        b = jax.random.uniform(kb, (1, fan_out), jnp.float32, -bound, bound)
        return w, b

    w0, b0 = lin(keys[0], keys[1], n_input, n_hidden)
    whs, bhs = [], []
    for l in range(n_layers - 1):
        w, b = lin(keys[2 + 2 * l], keys[3 + 2 * l], n_hidden, n_hidden)
        whs.append(w)
        bhs.append(b)
    if whs:
        wh = jnp.stack(whs, axis=0)                    # (L-1, H, H)
        bh = jnp.stack(bhs, axis=0)                    # (L-1, 1, H)
    else:
        wh = jnp.zeros((0, n_hidden, n_hidden), jnp.float32)
        bh = jnp.zeros((0, 1, n_hidden), jnp.float32)
    we, be = lin(keys[2 * n_layers], keys[2 * n_layers + 1], n_hidden, n_output)
    return (w0, b0, wh, bh, we, be)


def pinn_forward_ref(x, y, z, t, params):
    """Pure-JAX reference of PINN.forward for correctness checking."""
    w0, b0, wh, bh, we, be = params
    h = jnp.tanh(jnp.concatenate([x, y, z, t], axis=1) @ w0 + b0)
    for l in range(wh.shape[0]):
        h = jnp.tanh(h @ wh[l] + bh[l])
    return h @ we + be


# TODO(synk): equation_loss/data_loss rely on torch.autograd (PDE residual
# gradients); they are training-time losses, not part of the forward hot path,
# and are not reimplemented here.

if __name__ == "__main__":
    # layer_sizes = [N_INPUT=4, N_OUTPUT=4, N_HIDDEN=32, N_LAYERS=3]
    N_INPUT, N_OUTPUT, N_HIDDEN, N_LAYERS = 4, 4, 32, 3

    key = jax.random.PRNGKey(0)
    kp, kx, ky, kz, kt = jax.random.split(key, 5)
    params = init_params(kp, N_INPUT, N_OUTPUT, N_HIDDEN, N_LAYERS)

    # 256: exact tile; 200: padded tail; 1024: multi-step grid (2 tiles).
    for N in (256, 200, 1024):
        kx2, ky2, kz2, kt2 = (jax.random.fold_in(k, N) for k in (kx, ky, kz, kt))
        x = jax.random.normal(kx2, (N, 1), jnp.float32)
        y = jax.random.normal(ky2, (N, 1), jnp.float32)
        z = jax.random.normal(kz2, (N, 1), jnp.float32)
        t = jax.random.normal(kt2, (N, 1), jnp.float32)

        out = pinn_forward(x, y, z, t, params)
        out = jax.block_until_ready(out)

        ref = pinn_forward_ref(x, y, z, t, params)
        assert out.shape == (N, N_OUTPUT)
        assert jnp.allclose(out, ref, atol=3e-5, rtol=1e-5), "mismatch vs reference"

    print("KERNEL_OK")
</pallas_src>

<mosaic_0001>
module attributes {stable_mosaic.version = 11 : i64} {
  func.func @_pinn_mlp_kernel(%arg0: i32, %arg1: memref<4x256xf32, #tpu.memory_space<vmem>>, %arg2: memref<32x4xf32, #tpu.memory_space<vmem>>, %arg3: memref<32x1xf32, #tpu.memory_space<vmem>>, %arg4: memref<2x32x32xf32, #tpu.memory_space<vmem>>, %arg5: memref<2x32x1xf32, #tpu.memory_space<vmem>>, %arg6: memref<4x32xf32, #tpu.memory_space<vmem>>, %arg7: memref<4x1xf32, #tpu.memory_space<vmem>>, %arg8: memref<4x256xf32, #tpu.memory_space<vmem>>) attributes {dimension_semantics = [#tpu.dimension_semantics<parallel>], iteration_bounds = array<i64: 1>, scalar_prefetch = 0 : i64, scratch_operands = 0 : i64, tpu.core_type = #tpu.core_type<tc>, window_params = [{transform_indices = @transform_0, window_bounds = array<i64: 4, 256>}, {pipeline_mode = #tpu.pipeline_mode<synchronous>, transform_indices = @transform_1, window_bounds = array<i64: 32, 4>}, {pipeline_mode = #tpu.pipeline_mode<synchronous>, transform_indices = @transform_2, window_bounds = array<i64: 32, 1>}, {pipeline_mode = #tpu.pipeline_mode<synchronous>, transform_indices = @transform_3, window_bounds = array<i64: 2, 32, 32>}, {pipeline_mode = #tpu.pipeline_mode<synchronous>, transform_indices = @transform_4, window_bounds = array<i64: 2, 32, 1>}, {pipeline_mode = #tpu.pipeline_mode<synchronous>, transform_indices = @transform_5, window_bounds = array<i64: 4, 32>}, {pipeline_mode = #tpu.pipeline_mode<synchronous>, transform_indices = @transform_6, window_bounds = array<i64: 4, 1>}, {transform_indices = @transform_7, window_bounds = array<i64: 4, 256>}]} {
    %c0 = arith.constant 0 : index
    %c0_0 = arith.constant 0 : index
    %0 = vector.load %arg2[%c0, %c0_0] : memref<32x4xf32, #tpu.memory_space<vmem>>, vector<32x1xf32>
    %c0_1 = arith.constant 0 : index
    %c1 = arith.constant 1 : index
    %1 = vector.load %arg2[%c0_1, %c1] : memref<32x4xf32, #tpu.memory_space<vmem>>, vector<32x1xf32>
    %c0_2 = arith.constant 0 : index
    %c2 = arith.constant 2 : index
    %2 = vector.load %arg2[%c0_2, %c2] : memref<32x4xf32, #tpu.memory_space<vmem>>, vector<32x1xf32>
    %c0_3 = arith.constant 0 : index
    %c3 = arith.constant 3 : index
    %3 = vector.load %arg2[%c0_3, %c3] : memref<32x4xf32, #tpu.memory_space<vmem>>, vector<32x1xf32>
    %c0_4 = arith.constant 0 : index
    %c0_5 = arith.constant 0 : index
    %4 = vector.load %arg3[%c0_4, %c0_5] : memref<32x1xf32, #tpu.memory_space<vmem>>, vector<32x1xf32>
    %c0_6 = arith.constant 0 : index
    %c0_7 = arith.constant 0 : index
    %c0_8 = arith.constant 0 : index
    %5 = vector.load %arg4[%c0_6, %c0_7, %c0_8] : memref<2x32x32xf32, #tpu.memory_space<vmem>>, vector<1x32x32xf32>
    %6 = vector.shape_cast %5 : vector<1x32x32xf32> to vector<32x32xf32>
    %c1_9 = arith.constant 1 : index
    %c0_10 = arith.constant 0 : index
    %c0_11 = arith.constant 0 : index
    %7 = vector.load %arg4[%c1_9, %c0_10, %c0_11] : memref<2x32x32xf32, #tpu.memory_space<vmem>>, vector<1x32x32xf32>
    %8 = vector.shape_cast %7 : vector<1x32x32xf32> to vector<32x32xf32>
    %c0_12 = arith.constant 0 : index
    %c0_13 = arith.constant 0 : index
    %c0_14 = arith.constant 0 : index
    %9 = vector.load %arg5[%c0_12, %c0_13, %c0_14] : memref<2x32x1xf32, #tpu.memory_space<vmem>>, vector<1x32x1xf32>
    %10 = vector.shape_cast %9 : vector<1x32x1xf32> to vector<32x1xf32>
    %c1_15 = arith.constant 1 : index
    %c0_16 = arith.constant 0 : index
    %c0_17 = arith.constant 0 : index
    %11 = vector.load %arg5[%c1_15, %c0_16, %c0_17] : memref<2x32x1xf32, #tpu.memory_space<vmem>>, vector<1x32x1xf32>
    %12 = vector.shape_cast %11 : vector<1x32x1xf32> to vector<32x1xf32>
    %c0_18 = arith.constant 0 : index
    %c0_19 = arith.constant 0 : index
    %13 = vector.load %arg6[%c0_18, %c0_19] : memref<4x32xf32, #tpu.memory_space<vmem>>, vector<4x32xf32>
    %c0_20 = arith.constant 0 : index
    %c0_21 = arith.constant 0 : index
    %14 = vector.load %arg7[%c0_20, %c0_21] : memref<4x1xf32, #tpu.memory_space<vmem>>, vector<4x1xf32>
    %c0_i32 = arith.constant 0 : i32
    %c256_i32 = arith.constant 256 : i32
    %15 = arith.muli %c0_i32, %c256_i32 : i32
    %16 = tpu.assume_multiple %15, 256 : i32
    %c0_22 = arith.constant 0 : index
    %17 = arith.index_cast %16 : i32 to index
    %18 = vector.load %arg1[%c0_22, %17] : memref<4x256xf32, #tpu.memory_space<vmem>>, vector<4x256xf32>
    %19 = vector.extract_strided_slice %18 {offsets = [0, 0], sizes = [1, 256], strides = [1, 1]} : vector<4x256xf32> to vector<1x256xf32>
    %20 = vector.broadcast %0 : vector<32x1xf32> to vector<32x256xf32>
    %21 = vector.broadcast %19 : vector<1x256xf32> to vector<32x256xf32>
    %22 = arith.mulf %20, %21 : vector<32x256xf32>
    %23 = vector.broadcast %4 : vector<32x1xf32> to vector<32x256xf32>
    %24 = arith.addf %23, %22 : vector<32x256xf32>
    %25 = vector.extract_strided_slice %18 {offsets = [1, 0], sizes = [1, 256], strides = [1, 1]} : vector<4x256xf32> to vector<1x256xf32>
    %26 = vector.broadcast %1 : vector<32x1xf32> to vector<32x256xf32>
    %27 = vector.broadcast %25 : vector<1x256xf32> to vector<32x256xf32>
    %28 = arith.mulf %26, %27 : vector<32x256xf32>
    %29 = arith.addf %24, %28 : vector<32x256xf32>
    %30 = vector.extract_strided_slice %18 {offsets = [2, 0], sizes = [1, 256], strides = [1, 1]} : vector<4x256xf32> to vector<1x256xf32>
    %31 = vector.broadcast %2 : vector<32x1xf32> to vector<32x256xf32>
    %32 = vector.broadcast %30 : vector<1x256xf32> to vector<32x256xf32>
    %33 = arith.mulf %31, %32 : vector<32x256xf32>
    %34 = arith.addf %29, %33 : vector<32x256xf32>
    %35 = vector.extract_strided_slice %18 {offsets = [3, 0], sizes = [1, 256], strides = [1, 1]} : vector<4x256xf32> to vector<1x256xf32>
    %36 = vector.broadcast %3 : vector<32x1xf32> to vector<32x256xf32>
    %37 = vector.broadcast %35 : vector<1x256xf32> to vector<32x256xf32>
    %38 = arith.mulf %36, %37 : vector<32x256xf32>
    %39 = arith.addf %34, %38 : vector<32x256xf32>
    %40 = math.tanh %39 : vector<32x256xf32>
    %cst = arith.constant dense<0.000000e+00> : vector<32x256xf32>
    %41 = tpu.matmul %6, %40, %cst {dimension_numbers = #tpu.dot_dimension_numbers<[1], [0], [0], [1], [0, 0, 1, 1], [], []>} : vector<32x32xf32>, vector<32x256xf32>, vector<32x256xf32> -> vector<32x256xf32>
    %42 = vector.broadcast %10 : vector<32x1xf32> to vector<32x256xf32>
    %43 = arith.addf %41, %42 : vector<32x256xf32>
    %44 = math.tanh %43 : vector<32x256xf32>
    %cst_23 = arith.constant dense<0.000000e+00> : vector<32x256xf32>
    %45 = tpu.matmul %8, %44, %cst_23 {dimension_numbers = #tpu.dot_dimension_numbers<[1], [0], [0], [1], [0, 0, 1, 1], [], []>} : vector<32x32xf32>, vector<32x256xf32>, vector<32x256xf32> -> vector<32x256xf32>
    %46 = vector.broadcast %12 : vector<32x1xf32> to vector<32x256xf32>
    %47 = arith.addf %45, %46 : vector<32x256xf32>
    %48 = math.tanh %47 : vector<32x256xf32>
    %cst_24 = arith.constant dense<0.000000e+00> : vector<4x256xf32>
    %49 = tpu.matmul %13, %48, %cst_24 {dimension_numbers = #tpu.dot_dimension_numbers<[1], [0], [0], [1], [0, 0, 1, 1], [], []>} : vector<4x32xf32>, vector<32x256xf32>, vector<4x256xf32> -> vector<4x256xf32>
    %50 = vector.broadcast %14 : vector<4x1xf32> to vector<4x256xf32>
    %51 = arith.addf %49, %50 : vector<4x256xf32>
    %c0_25 = arith.constant 0 : index
    %52 = arith.index_cast %16 : i32 to index
    %53 = vector.load %arg8[%c0_25, %52] : memref<4x256xf32, #tpu.memory_space<vmem>>, vector<4x256xf32>
    tpu.vector_store %arg8[%c0_25, %52], %51 {strides = array<i32>} : memref<4x256xf32, #tpu.memory_space<vmem>>, vector<4x256xf32>,
    %c1_i32 = arith.constant 1 : i32
    return
  }
  func.func @transform_0(%arg0: i32) -> (i32, i32) {
    %c0_i32 = arith.constant 0 : i32
    %c0_i32_0 = arith.constant 0 : i32
    return %c0_i32, %arg0 : i32, i32
  }
  func.func @transform_1(%arg0: i32) -> (i32, i32) {
    %c0_i32 = arith.constant 0 : i32
    %c0_i32_0 = arith.constant 0 : i32
    %c0_i32_1 = arith.constant 0 : i32
    return %c0_i32, %c0_i32_0 : i32, i32
  }
  func.func @transform_2(%arg0: i32) -> (i32, i32) {
    %c0_i32 = arith.constant 0 : i32
    %c0_i32_0 = arith.constant 0 : i32
    %c0_i32_1 = arith.constant 0 : i32
    return %c0_i32, %c0_i32_0 : i32, i32
  }
  func.func @transform_3(%arg0: i32) -> (i32, i32, i32) {
    %c0_i32 = arith.constant 0 : i32
    %c0_i32_0 = arith.constant 0 : i32
    %c0_i32_1 = arith.constant 0 : i32
    %c0_i32_2 = arith.constant 0 : i32
    return %c0_i32, %c0_i32_0, %c0_i32_1 : i32, i32, i32
  }
  func.func @transform_4(%arg0: i32) -> (i32, i32, i32) {
    %c0_i32 = arith.constant 0 : i32
    %c0_i32_0 = arith.constant 0 : i32
    %c0_i32_1 = arith.constant 0 : i32
    %c0_i32_2 = arith.constant 0 : i32
    return %c0_i32, %c0_i32_0, %c0_i32_1 : i32, i32, i32
  }
  func.func @transform_5(%arg0: i32) -> (i32, i32) {
    %c0_i32 = arith.constant 0 : i32
    %c0_i32_0 = arith.constant 0 : i32
    %c0_i32_1 = arith.constant 0 : i32
    return %c0_i32, %c0_i32_0 : i32, i32
  }
  func.func @transform_6(%arg0: i32) -> (i32, i32) {
    %c0_i32 = arith.constant 0 : i32
    %c0_i32_0 = arith.constant 0 : i32
    %c0_i32_1 = arith.constant 0 : i32
    return %c0_i32, %c0_i32_0 : i32, i32
  }
  func.func @transform_7(%arg0: i32) -> (i32, i32) {
    %c0_i32 = arith.constant 0 : i32
    %c0_i32_0 = arith.constant 0 : i32
    return %c0_i32, %arg0 : i32, i32
  }
}

</mosaic_0001>

<llo_original>
// kernel: tpu_custom_call.1
$region0: #{tpu_custom_call.1}
  #allocation0 [shape = 'u32[]', space=smem, size = 0x4, offset = 0x4, fixed_abs, tag = 'smem constant byte address 0x4 - core index']
  #allocation1 [shape = 'u32[144,128]{1,0:T(1,128)}', space=vmem, size = 0x12000, scoped, tag = 'internal scratch']
  %s0 = inlined_call_operand.vmem [shape: f32[4,256], index: 0, kind: input, shape index: {}]
  %s1 = inlined_call_operand.vmem [shape: f32[32,4], index: 1, kind: input, shape index: {}]
  %s2 = inlined_call_operand.vmem [shape: f32[32,1], index: 2, kind: input, shape index: {}]
  %s3 = inlined_call_operand.vmem [shape: f32[2,32,32], index: 3, kind: input, shape index: {}]
  %s4 = inlined_call_operand.vmem [shape: f32[2,32,1], index: 4, kind: input, shape index: {}]
  %s5 = inlined_call_operand.vmem [shape: f32[4,32], index: 5, kind: input, shape index: {}]
  %s6 = inlined_call_operand.vmem [shape: f32[4,1], index: 6, kind: input, shape index: {}]
  %s7 = inlined_call_operand.hbm [shape: f32[4,256], index: 7, kind: output, shape index: {}]
  %s8 = sld [smem:[#allocation0]]
  $region38: #{tpu_custom_call.1} parent=0
    _
  %s10 = ssub.s32 1, %s8
  %s11 = scalar_select 0, %s10, %s8
  $region1: #{tpu_custom_call.1} parent=0
    #allocation2 [shape = 'u8[4096]{0}', space=vmem, size = 0x1000, scoped, tag = 'output window, operand 0, single buffered']
    #allocation3 [shape = 's32[1]{0}', space=sflag, size = 0x4, scoped, tag = 'scoped memory for tpu_custom_call.1']
    %12 = vsyncpa [#allocation3], 0
    // Predicated region
    $region2: #{tpu_custom_call.1} parent=1 // pred_check
      _
    $region3: #{tpu_custom_call.1} parent=1 // pred_check_branch
      %14 = sbr.rel (0) target = $region5
    $region4: #{tpu_custom_call.1} parent=1 // pred_region
      _
    $region5: #{tpu_custom_call.1} parent=1 // pred_fallthru
      _
    // Predicated region
    $region6: #{tpu_custom_call.1} parent=1 // pred_check
      _
    $region7: #{tpu_custom_call.1} parent=1 // pred_check_branch
      %16 = sbr.rel (0) target = $region9
    $region8: #{tpu_custom_call.1} parent=1 // pred_region
      _
    $region9: #{tpu_custom_call.1} parent=1 // pred_fallthru
      _
    // Predicated region
    $region10: #{tpu_custom_call.1} parent=1 // pred_check
      _
    $region11: #{tpu_custom_call.1} parent=1 // pred_check_branch
      %18 = sbr.rel (0) target = $region13
    $region12: #{tpu_custom_call.1} parent=1 // pred_region
      _
    $region13: #{tpu_custom_call.1} parent=1 // pred_fallthru
      _
    // Predicated region
    $region14: #{tpu_custom_call.1} parent=1 // pred_check
      _
    $region15: #{tpu_custom_call.1} parent=1 // pred_check_branch
      %20 = sbr.rel (0) target = $region17
    $region16: #{tpu_custom_call.1} parent=1 // pred_region
      _
    $region17: #{tpu_custom_call.1} parent=1 // pred_fallthru
      _
    // Predicated region
    $region18: #{tpu_custom_call.1} parent=1 // pred_check
      _
    $region19: #{tpu_custom_call.1} parent=1 // pred_check_branch
      %22 = sbr.rel (0) target = $region21
    $region20: #{tpu_custom_call.1} parent=1 // pred_region
      _
    $region21: #{tpu_custom_call.1} parent=1 // pred_fallthru
      _
    // Predicated region
    $region22: #{tpu_custom_call.1} parent=1 // pred_check
      _
    $region23: #{tpu_custom_call.1} parent=1 // pred_check_branch
      %24 = sbr.rel (0) target = $region25
    $region24: #{tpu_custom_call.1} parent=1 // pred_region
      _
    $region25: #{tpu_custom_call.1} parent=1 // pred_fallthru
      _
    // Predicated region
    $region26: #{tpu_custom_call.1} parent=1 // pred_check
      _
    $region27: #{tpu_custom_call.1} parent=1 // pred_check_branch
      %26 = sbr.rel (0) target = $region29
    $region28: #{tpu_custom_call.1} parent=1 // pred_region
      _
    $region29: #{tpu_custom_call.1} parent=1 // pred_fallthru
      _
    %v27 = vld [vmem:[%s1] sm:$0xff]
    %v28 = vld [vmem:[%s1 + $0x8] sm:$0xff]
    %v29 = vld [vmem:[%s1 + $0x10] sm:$0xff]
    %v30 = vld [vmem:[%s1 + $0x18] sm:$0xff]
    %v31 = vld [vmem:[%s2] sm:$0xff]
    %v32 = vld [vmem:[%s2 + $0x8] sm:$0xff]
    %v33 = vld [vmem:[%s2 + $0x10] sm:$0xff]
    %v34 = vld [vmem:[%s2 + $0x18] sm:$0xff]
    %v35 = vld [vmem:[%s3] sm:$0xff]
    %v36 = vld [vmem:[%s3 + $0x8] sm:$0xff]
    %v37 = vld [vmem:[%s3 + $0x10] sm:$0xff]
    %v38 = vld [vmem:[%s3 + $0x18] sm:$0xff]
    %s39 = scalar_lea.vmem %s3, 32
    %v40 = vld [vmem:[%s39] sm:$0xff]
    %v41 = vld [vmem:[%s39 + $0x8] sm:$0xff]
    %v42 = vld [vmem:[%s39 + $0x10] sm:$0xff]
    %v43 = vld [vmem:[%s39 + $0x18] sm:$0xff]
    %v44 = vld [vmem:[%s4] sm:$0xff]
    %v45 = vld [vmem:[%s4 + $0x8] sm:$0xff]
    %v46 = vld [vmem:[%s4 + $0x10] sm:$0xff]
    %v47 = vld [vmem:[%s4 + $0x18] sm:$0xff]
    %s48 = scalar_lea.vmem %s4, 32
    %v49 = vld [vmem:[%s48] sm:$0xff]
    %v50 = vld [vmem:[%s48 + $0x8] sm:$0xff]
    %v51 = vld [vmem:[%s48 + $0x10] sm:$0xff]
    %v52 = vld [vmem:[%s48 + $0x18] sm:$0xff]
    %v53 = vld [vmem:[%s5] sm:$0xf]
    %v54 = vld [vmem:[%s6] sm:$0xf]
    %v55 = vld [vmem:[%s0] sm:$0xff]
    %57 = vset.pattern.permute.xlu0 0
    %58 = vperm.xlu0 %57, %v27
    %v59 = vpop.permute.xlu0 %58
    %62 = vset.pattern.permute.xlu0 0
    %63 = vperm.xlu0 %62, %v28
    %v64 = vpop.permute.xlu0 %63
    %67 = vset.pattern.permute.xlu0 0
    %68 = vperm.xlu0 %67, %v29
    %v69 = vpop.permute.xlu0 %68
    %72 = vset.pattern.permute.xlu0 0
    %73 = vperm.xlu0 %72, %v30
    %v74 = vpop.permute.xlu0 %73
    %v77 = vlaneseq
    %v78 = vshrl.u32 %v77, 7
    %v79 = vsub.s32 0, %v78
    %v80 = vrot.slane %v55, %v79
    %v81 = vlaneseq
    %v82 = vshrl.u32 %v81, 7
    %v83 = vsub.s32 4, %v82
    %v84 = vrot.slane %v55, %v83
    %v87 = vlaneseq
    %v88 = vshrl.u32 %v87, 7
    %v89 = vsub.s32 0, %v88
    %v90 = vrot.slane %v80, %v89
    %v91 = vlaneseq
    %v92 = vshrl.u32 %v91, 7
    %v93 = vsub.s32 0, %v92
    %v94 = vrot.slane %v84, %v93
    %v95 = vmul.f32 %v59, %v90
    %v96 = vmul.f32 %v59, %v94
    %v97 = vmul.f32 %v64, %v90
    %v98 = vmul.f32 %v64, %v94
    %v99 = vmul.f32 %v69, %v90
    %v100 = vmul.f32 %v69, %v94
    %v101 = vmul.f32 %v74, %v90
    %v102 = vmul.f32 %v74, %v94
    %104 = vset.pattern.permute.xlu0 0
    %105 = vperm.xlu0 %104, %v31
    %v106 = vpop.permute.xlu0 %105
    %109 = vset.pattern.permute.xlu0 0
    %110 = vperm.xlu0 %109, %v32
    %v111 = vpop.permute.xlu0 %110
    %114 = vset.pattern.permute.xlu0 0
    %115 = vperm.xlu0 %114, %v33
    %v116 = vpop.permute.xlu0 %115
    %119 = vset.pattern.permute.xlu0 0
    %120 = vperm.xlu0 %119, %v34
    %v121 = vpop.permute.xlu0 %120
    %v123 = vadd.f32 %v106, %v95
    %v124 = vadd.f32 %v106, %v96
    %v125 = vadd.f32 %v111, %v97
    %v126 = vadd.f32 %v111, %v98
    %v127 = vadd.f32 %v116, %v99
    %v128 = vadd.f32 %v116, %v100
    %v129 = vadd.f32 %v121, %v101
    %v130 = vadd.f32 %v121, %v102
    %131 = vset.pattern.permute.xlu0 1
    %132 = vperm.xlu0 %131, %v27
    %v133 = vpop.permute.xlu0 %132
    %135 = vset.pattern.permute.xlu0 1
    %136 = vperm.xlu0 %135, %v28
    %v137 = vpop.permute.xlu0 %136
    %139 = vset.pattern.permute.xlu0 1
    %140 = vperm.xlu0 %139, %v29
    %v141 = vpop.permute.xlu0 %140
    %143 = vset.pattern.permute.xlu0 1
    %144 = vperm.xlu0 %143, %v30
    %v145 = vpop.permute.xlu0 %144
    %v147 = vlaneseq
    %v148 = vshrl.u32 %v147, 7
    %v149 = vsub.s32 1, %v148
    %v150 = vrot.slane %v55, %v149
    %v151 = vlaneseq
    %v152 = vshrl.u32 %v151, 7
    %v153 = vsub.s32 5, %v152
    %v154 = vrot.slane %v55, %v153
    %v157 = vlaneseq
    %v158 = vshrl.u32 %v157, 7
    %v159 = vsub.s32 1, %v158
    %v160 = vrot.slane %v150, %v159
    %v161 = vlaneseq
    %v162 = vshrl.u32 %v161, 7
    %v163 = vsub.s32 1, %v162
    %v164 = vrot.slane %v154, %v163
    %v165 = vmul.f32 %v133, %v160
    %v166 = vmul.f32 %v133, %v164
    %v167 = vmul.f32 %v137, %v160
    %v168 = vmul.f32 %v137, %v164
    %v169 = vmul.f32 %v141, %v160
    %v170 = vmul.f32 %v141, %v164
    %v171 = vmul.f32 %v145, %v160
    %v172 = vmul.f32 %v145, %v164
    %v173 = vadd.f32 %v123, %v165
    %v174 = vadd.f32 %v124, %v166
    %v175 = vadd.f32 %v125, %v167
    %v176 = vadd.f32 %v126, %v168
    %v177 = vadd.f32 %v127, %v169
    %v178 = vadd.f32 %v128, %v170
    %v179 = vadd.f32 %v129, %v171
    %v180 = vadd.f32 %v130, %v172
    %181 = vset.pattern.permute.xlu0 2
    %182 = vperm.xlu0 %181, %v27
    %v183 = vpop.permute.xlu0 %182
    %185 = vset.pattern.permute.xlu0 2
    %186 = vperm.xlu0 %185, %v28
    %v187 = vpop.permute.xlu0 %186
    %189 = vset.pattern.permute.xlu0 2
    %190 = vperm.xlu0 %189, %v29
    %v191 = vpop.permute.xlu0 %190
    %193 = vset.pattern.permute.xlu0 2
    %194 = vperm.xlu0 %193, %v30
    %v195 = vpop.permute.xlu0 %194
    %v197 = vlaneseq
    %v198 = vshrl.u32 %v197, 7
    %v199 = vsub.s32 2, %v198
    %v200 = vrot.slane %v55, %v199
    %v201 = vlaneseq
    %v202 = vshrl.u32 %v201, 7
    %v203 = vsub.s32 6, %v202
    %v204 = vrot.slane %v55, %v203
    %v207 = vlaneseq
    %v208 = vshrl.u32 %v207, 7
    %v209 = vsub.s32 2, %v208
    %v210 = vrot.slane %v200, %v209
    %v211 = vlaneseq
    %v212 = vshrl.u32 %v211, 7
    %v213 = vsub.s32 2, %v212
    %v214 = vrot.slane %v204, %v213
    %v215 = vmul.f32 %v183, %v210
    %v216 = vmul.f32 %v183, %v214
    %v217 = vmul.f32 %v187, %v210
    %v218 = vmul.f32 %v187, %v214
    %v219 = vmul.f32 %v191, %v210
    %v220 = vmul.f32 %v191, %v214
    %v221 = vmul.f32 %v195, %v210
    %v222 = vmul.f32 %v195, %v214
    %v223 = vadd.f32 %v173, %v215
    %v224 = vadd.f32 %v174, %v216
    %v225 = vadd.f32 %v175, %v217
    %v226 = vadd.f32 %v176, %v218
    %v227 = vadd.f32 %v177, %v219
    %v228 = vadd.f32 %v178, %v220
    %v229 = vadd.f32 %v179, %v221
    %v230 = vadd.f32 %v180, %v222
    %231 = vset.pattern.permute.xlu0 3
    %232 = vperm.xlu0 %231, %v27
    %v233 = vpop.permute.xlu0 %232
    %235 = vset.pattern.permute.xlu0 3
    %236 = vperm.xlu0 %235, %v28
    %v237 = vpop.permute.xlu0 %236
    %239 = vset.pattern.permute.xlu0 3
    %240 = vperm.xlu0 %239, %v29
    %v241 = vpop.permute.xlu0 %240
    %243 = vset.pattern.permute.xlu0 3
    %244 = vperm.xlu0 %243, %v30
    %v245 = vpop.permute.xlu0 %244
    %v247 = vlaneseq
    %v248 = vshrl.u32 %v247, 7
    %v249 = vsub.s32 3, %v248
    %v250 = vrot.slane %v55, %v249
    %v251 = vlaneseq
    %v252 = vshrl.u32 %v251, 7
    %v253 = vsub.s32 7, %v252
    %v254 = vrot.slane %v55, %v253
    %v257 = vlaneseq
    %v258 = vshrl.u32 %v257, 7
    %v259 = vsub.s32 3, %v258
    %v260 = vrot.slane %v250, %v259
    %v261 = vlaneseq
    %v262 = vshrl.u32 %v261, 7
    %v263 = vsub.s32 3, %v262
    %v264 = vrot.slane %v254, %v263
    %v265 = vmul.f32 %v233, %v260
    %v266 = vmul.f32 %v233, %v264
    %v267 = vmul.f32 %v237, %v260
    %v268 = vmul.f32 %v237, %v264
    %v269 = vmul.f32 %v241, %v260
    %v270 = vmul.f32 %v241, %v264
    %v271 = vmul.f32 %v245, %v260
    %v272 = vmul.f32 %v245, %v264
    %v273 = vadd.f32 %v223, %v265
    %v274 = vadd.f32 %v224, %v266
    %v275 = vadd.f32 %v225, %v267
    %v276 = vadd.f32 %v226, %v268
    %v277 = vadd.f32 %v227, %v269
    %v278 = vadd.f32 %v228, %v270
    %v279 = vadd.f32 %v229, %v271
    %v280 = vadd.f32 %v230, %v272
    %v281 = vtanh.pop %v273
    %v282 = vtanh.pop %v274
    %v283 = vtanh.pop %v275
    %v284 = vtanh.pop %v276
    %v285 = vtanh.pop %v277
    %v286 = vtanh.pop %v278
    %v287 = vtanh.pop %v279
    %v288 = vtanh.pop %v280
    %290 = vset.pattern.permute.xlu0 0
    %291 = vperm.xlu0 %290, %v44
    %v292 = vpop.permute.xlu0 %291
    %295 = vset.pattern.permute.xlu0 0
    %296 = vperm.xlu0 %295, %v45
    %v297 = vpop.permute.xlu0 %296
    %300 = vset.pattern.permute.xlu0 0
    %301 = vperm.xlu0 %300, %v46
    %v302 = vpop.permute.xlu0 %301
    %305 = vset.pattern.permute.xlu0 0
    %306 = vperm.xlu0 %305, %v47
    %v307 = vpop.permute.xlu0 %306
    %vm309 = vcmask 261120
    %v311 = vsel %vm309, %v35, 0
    %v314 = vsel %vm309, %v36, 0
    %v317 = vsel %vm309, %v37, 0
    %v320 = vsel %vm309, %v38, 0
    %322 = vmatprep.subr.mxu0 %v282
    %323 = vmatpush1.msra.mxu0 %v281
    %324 = vmatprep.subr.mxu0 %v284
    %325 = vmatpush1.msra.mxu0 %v283
    %326 = vmatprep.subr.mxu0 %v286
    %327 = vmatpush1.msra.mxu0 %v285
    %328 = vmatprep.subr.mxu0 %v288
    %329 = vmatpush1.msra.mxu0 %v287
    %330 = vmatprep.subr.mxu0 0.0
    %331 = vmatpush1.msra.mxu0 0.0
    %332 = vmatprep.subr.mxu0 0.0
    %333 = vmatpush1.msra.mxu0 0.0
    %334 = vmatprep.subr.mxu0 0.0
    %335 = vmatpush1.msra.mxu0 0.0
    %336 = vmatprep.subr.mxu0 0.0
    %337 = vmatpush1.msra.mxu0 0.0
    %338 = vmatprep.subr.mxu0 0.0
    %339 = vmatpush1.msra.mxu0 0.0
    %340 = vmatprep.subr.mxu0 0.0
    %341 = vmatpush1.msra.mxu0 0.0
    %342 = vmatprep.subr.mxu0 0.0
    %343 = vmatpush1.msra.mxu0 0.0
    %344 = vmatprep.subr.mxu0 0.0
    %345 = vmatpush1.msra.mxu0 0.0
    %346 = vmatprep.subr.mxu0 0.0
    %347 = vmatpush1.msra.mxu0 0.0
    %348 = vmatprep.subr.mxu0 0.0
    %349 = vmatpush1.msra.mxu0 0.0
    %350 = vmatprep.subr.mxu0 0.0
    %351 = vmatpush1.msra.mxu0 0.0
    %352 = vmatprep.subr.mxu0 0.0
    %353 = vmatpush1.msra.mxu0 0.0
    %354 = vmatprep.subr.mxu0 0.0
    %355 = vmatpush1.msra.mxu0 0.0
    %356 = vmatprep.subr.mxu0 0.0
    %357 = vmatpush1.msra.mxu0 0.0
    %358 = vmatprep.subr.mxu0 0.0
    %359 = vmatpush1.msra.mxu0 0.0
    %360 = vmatprep.subr.mxu0 0.0
    %361 = vmatpush1.msra.mxu0 0.0
    %362 = vmatprep.subr.mxu0 0.0
    %363 = vmatpush1.msra.mxu0 0.0
    %364 = vmatprep.subr.mxu0 0.0
    %365 = vmatpush1.msra.mxu0 0.0
    %366 = vmatprep.subr.mxu0 0.0
    %367 = vmatpush1.msra.mxu0 0.0
    %368 = vmatprep.subr.mxu0 0.0
    %369 = vmatpush1.msra.mxu0 0.0
    %370 = vmatprep.subr.mxu0 0.0
    %371 = vmatpush1.msra.mxu0 0.0
    %372 = vmatprep.subr.mxu0 0.0
    %373 = vmatpush1.msra.mxu0 0.0
    %374 = vmatprep.subr.mxu0 0.0
    %375 = vmatpush1.msra.mxu0 0.0
    %376 = vmatprep.subr.mxu0 0.0
    %377 = vmatpush1.msra.mxu0 0.0
    %378 = vmatprep.subr.mxu0 0.0
    %379 = vmatpush1.msra.mxu0 0.0
    %380 = vmatprep.subr.mxu0 0.0
    %381 = vmatpush1.msra.mxu0 0.0
    %382 = vmatprep.subr.mxu0 0.0
    %383 = vmatpush1.msra.mxu0 0.0
    %384 = vmatprep.subr.mxu0 0.0
    %385 = vmatpush1.msra.mxu0 0.0
    %386 = vmatprep.mubr.f32.mxu0 0.0
    %387 = vmatmul.mubr.f32.gmra.mrb[0].mxu0 %v311
    %v388 = vpop.f32.mrb[0].mxu0
    %v389 = vadd.f32 %v292, %v388
    %v390 = vpop.f32.mrb[0].mxu0
    %v391 = vadd.f32 %v292, %v390
    %392 = vmatprep.mubr.f32.mxu0 0.0
    %393 = vmatmul.mubr.f32.gmra.mrb[0].mxu0 %v314
    %v394 = vpop.f32.mrb[0].mxu0
    %v395 = vadd.f32 %v297, %v394
    %v396 = vpop.f32.mrb[0].mxu0
    %v397 = vadd.f32 %v297, %v396
    %398 = vmatprep.mubr.f32.mxu0 0.0
    %399 = vmatmul.mubr.f32.gmra.mrb[0].mxu0 %v317
    %v400 = vpop.f32.mrb[0].mxu0
    %v401 = vadd.f32 %v302, %v400
    %v402 = vpop.f32.mrb[0].mxu0
    %v403 = vadd.f32 %v302, %v402
    %404 = vmatprep.mubr.f32.mxu0 0.0
    %405 = vmatmul.mubr.f32.gmra.mrb[0].mxu0 %v320
    %v406 = vpop.f32.mrb[0].mxu0
    %v407 = vadd.f32 %v307, %v406
    %v408 = vpop.f32.mrb[0].mxu0
    %v409 = vadd.f32 %v307, %v408
    %410 = vdwg.mxu0
    %v411 = vtanh.pop %v389
    %v412 = vtanh.pop %v391
    %v413 = vtanh.pop %v395
    %v414 = vtanh.pop %v397
    %v415 = vtanh.pop %v401
    %v416 = vtanh.pop %v403
    %v417 = vtanh.pop %v407
    %v418 = vtanh.pop %v409
    %420 = vset.pattern.permute.xlu0 0
    %421 = vperm.xlu0 %420, %v49
    %v422 = vpop.permute.xlu0 %421
    %425 = vset.pattern.permute.xlu0 0
    %426 = vperm.xlu0 %425, %v50
    %v427 = vpop.permute.xlu0 %426
    %430 = vset.pattern.permute.xlu0 0
    %431 = vperm.xlu0 %430, %v51
    %v432 = vpop.permute.xlu0 %431
    %435 = vset.pattern.permute.xlu0 0
    %436 = vperm.xlu0 %435, %v52
    %v437 = vpop.permute.xlu0 %436
    %v440 = vsel %vm309, %v40, 0
    %v443 = vsel %vm309, %v41, 0
    %v446 = vsel %vm309, %v42, 0
    %v449 = vsel %vm309, %v43, 0
    %451 = vmatprep.subr.mxu0 %v412
    %452 = vmatpush1.msra.mxu0 %v411
    %453 = vmatprep.subr.mxu0 %v414
    %454 = vmatpush1.msra.mxu0 %v413
    %455 = vmatprep.subr.mxu0 %v416
    %456 = vmatpush1.msra.mxu0 %v415
    %457 = vmatprep.subr.mxu0 %v418
    %458 = vmatpush1.msra.mxu0 %v417
    %459 = vmatprep.subr.mxu0 0.0
    %460 = vmatpush1.msra.mxu0 0.0
    %461 = vmatprep.subr.mxu0 0.0
    %462 = vmatpush1.msra.mxu0 0.0
    %463 = vmatprep.subr.mxu0 0.0
    %464 = vmatpush1.msra.mxu0 0.0
    %465 = vmatprep.subr.mxu0 0.0
    %466 = vmatpush1.msra.mxu0 0.0
    %467 = vmatprep.subr.mxu0 0.0
    %468 = vmatpush1.msra.mxu0 0.0
    %469 = vmatprep.subr.mxu0 0.0
    %470 = vmatpush1.msra.mxu0 0.0
    %471 = vmatprep.subr.mxu0 0.0
    %472 = vmatpush1.msra.mxu0 0.0
    %473 = vmatprep.subr.mxu0 0.0
    %474 = vmatpush1.msra.mxu0 0.0
    %475 = vmatprep.subr.mxu0 0.0
    %476 = vmatpush1.msra.mxu0 0.0
    %477 = vmatprep.subr.mxu0 0.0
    %478 = vmatpush1.msra.mxu0 0.0
    %479 = vmatprep.subr.mxu0 0.0
    %480 = vmatpush1.msra.mxu0 0.0
    %481 = vmatprep.subr.mxu0 0.0
    %482 = vmatpush1.msra.mxu0 0.0
    %483 = vmatprep.subr.mxu0 0.0
    %484 = vmatpush1.msra.mxu0 0.0
    %485 = vmatprep.subr.mxu0 0.0
    %486 = vmatpush1.msra.mxu0 0.0
    %487 = vmatprep.subr.mxu0 0.0
    %488 = vmatpush1.msra.mxu0 0.0
    %489 = vmatprep.subr.mxu0 0.0
    %490 = vmatpush1.msra.mxu0 0.0
    %491 = vmatprep.subr.mxu0 0.0
    %492 = vmatpush1.msra.mxu0 0.0
    %493 = vmatprep.subr.mxu0 0.0
    %494 = vmatpush1.msra.mxu0 0.0
    %495 = vmatprep.subr.mxu0 0.0
    %496 = vmatpush1.msra.mxu0 0.0
    %497 = vmatprep.subr.mxu0 0.0
    %498 = vmatpush1.msra.mxu0 0.0
    %499 = vmatprep.subr.mxu0 0.0
    %500 = vmatpush1.msra.mxu0 0.0
    %501 = vmatprep.subr.mxu0 0.0
    %502 = vmatpush1.msra.mxu0 0.0
    %503 = vmatprep.subr.mxu0 0.0
    %504 = vmatpush1.msra.mxu0 0.0
    %505 = vmatprep.subr.mxu0 0.0
    %506 = vmatpush1.msra.mxu0 0.0
    %507 = vmatprep.subr.mxu0 0.0
    %508 = vmatpush1.msra.mxu0 0.0
    %509 = vmatprep.subr.mxu0 0.0
    %510 = vmatpush1.msra.mxu0 0.0
    %511 = vmatprep.subr.mxu0 0.0
    %512 = vmatpush1.msra.mxu0 0.0
    %513 = vmatprep.subr.mxu0 0.0
    %514 = vmatpush1.msra.mxu0 0.0
    %515 = vmatprep.mubr.f32.mxu0 0.0
    %516 = vmatmul.mubr.f32.gmra.mrb[0].mxu0 %v440
    %v517 = vpop.f32.mrb[0].mxu0
    %v518 = vadd.f32 %v422, %v517
    %v519 = vpop.f32.mrb[0].mxu0
    %v520 = vadd.f32 %v422, %v519
    %521 = vmatprep.mubr.f32.mxu0 0.0
    %522 = vmatmul.mubr.f32.gmra.mrb[0].mxu0 %v443
    %v523 = vpop.f32.mrb[0].mxu0
    %v524 = vadd.f32 %v427, %v523
    %v525 = vpop.f32.mrb[0].mxu0
    %v526 = vadd.f32 %v427, %v525
    %527 = vmatprep.mubr.f32.mxu0 0.0
    %528 = vmatmul.mubr.f32.gmra.mrb[0].mxu0 %v446
    %v529 = vpop.f32.mrb[0].mxu0
    %v530 = vadd.f32 %v432, %v529
    %v531 = vpop.f32.mrb[0].mxu0
    %v532 = vadd.f32 %v432, %v531
    %533 = vmatprep.mubr.f32.mxu0 0.0
    %534 = vmatmul.mubr.f32.gmra.mrb[0].mxu0 %v449
    %v535 = vpop.f32.mrb[0].mxu0
    %v536 = vadd.f32 %v437, %v535
    %v537 = vpop.f32.mrb[0].mxu0
    %v538 = vadd.f32 %v437, %v537
    %539 = vdwg.mxu0
    %v540 = vtanh.pop %v518
    %v541 = vtanh.pop %v520
    %v542 = vtanh.pop %v524
    %v543 = vtanh.pop %v526
    %v544 = vtanh.pop %v530
    %v545 = vtanh.pop %v532
    %v546 = vtanh.pop %v536
    %v547 = vtanh.pop %v538
    %549 = vset.pattern.permute.xlu0 0
    %550 = vperm.xlu0 %549, %v54
    %v551 = vpop.permute.xlu0 %550
    %v554 = vsel %vm309, %v53, 0
    %556 = vmatprep.subr.mxu0 %v541
    %557 = vmatpush1.msra.mxu0 %v540
    %558 = vmatprep.subr.mxu0 %v543
    %559 = vmatpush1.msra.mxu0 %v542
    %560 = vmatprep.subr.mxu0 %v545
    %561 = vmatpush1.msra.mxu0 %v544
    %562 = vmatprep.subr.mxu0 %v547
    %563 = vmatpush1.msra.mxu0 %v546
    %564 = vmatprep.subr.mxu0 0.0
    %565 = vmatpush1.msra.mxu0 0.0
    %566 = vmatprep.subr.mxu0 0.0
    %567 = vmatpush1.msra.mxu0 0.0
    %568 = vmatprep.subr.mxu0 0.0
    %569 = vmatpush1.msra.mxu0 0.0
    %570 = vmatprep.subr.mxu0 0.0
    %571 = vmatpush1.msra.mxu0 0.0
    %572 = vmatprep.subr.mxu0 0.0
    %573 = vmatpush1.msra.mxu0 0.0
    %574 = vmatprep.subr.mxu0 0.0
    %575 = vmatpush1.msra.mxu0 0.0
    %576 = vmatprep.subr.mxu0 0.0
    %577 = vmatpush1.msra.mxu0 0.0
    %578 = vmatprep.subr.mxu0 0.0
    %579 = vmatpush1.msra.mxu0 0.0
    %580 = vmatprep.subr.mxu0 0.0
    %581 = vmatpush1.msra.mxu0 0.0
    %582 = vmatprep.subr.mxu0 0.0
    %583 = vmatpush1.msra.mxu0 0.0
    %584 = vmatprep.subr.mxu0 0.0
    %585 = vmatpush1.msra.mxu0 0.0
    %586 = vmatprep.subr.mxu0 0.0
    %587 = vmatpush1.msra.mxu0 0.0
    %588 = vmatprep.subr.mxu0 0.0
    %589 = vmatpush1.msra.mxu0 0.0
    %590 = vmatprep.subr.mxu0 0.0
    %591 = vmatpush1.msra.mxu0 0.0
    %592 = vmatprep.subr.mxu0 0.0
    %593 = vmatpush1.msra.mxu0 0.0
    %594 = vmatprep.subr.mxu0 0.0
    %595 = vmatpush1.msra.mxu0 0.0
    %596 = vmatprep.subr.mxu0 0.0
    %597 = vmatpush1.msra.mxu0 0.0
    %598 = vmatprep.subr.mxu0 0.0
    %599 = vmatpush1.msra.mxu0 0.0
    %600 = vmatprep.subr.mxu0 0.0
    %601 = vmatpush1.msra.mxu0 0.0
    %602 = vmatprep.subr.mxu0 0.0
    %603 = vmatpush1.msra.mxu0 0.0
    %604 = vmatprep.subr.mxu0 0.0
    %605 = vmatpush1.msra.mxu0 0.0
    %606 = vmatprep.subr.mxu0 0.0
    %607 = vmatpush1.msra.mxu0 0.0
    %608 = vmatprep.subr.mxu0 0.0
    %609 = vmatpush1.msra.mxu0 0.0
    %610 = vmatprep.subr.mxu0 0.0
    %611 = vmatpush1.msra.mxu0 0.0
    %612 = vmatprep.subr.mxu0 0.0
    %613 = vmatpush1.msra.mxu0 0.0
    %614 = vmatprep.subr.mxu0 0.0
    %615 = vmatpush1.msra.mxu0 0.0
    %616 = vmatprep.subr.mxu0 0.0
    %617 = vmatpush1.msra.mxu0 0.0
    %618 = vmatprep.subr.mxu0 0.0
    %619 = vmatpush1.msra.mxu0 0.0
    %620 = vmatprep.mubr.f32.mxu0 0.0
    %621 = vmatmul.mubr.f32.gmra.mrb[0].mxu0 %v554
    %v622 = vpop.f32.mrb[0].mxu0
    %v623 = vadd.f32 %v551, %v622
    %v624 = vpop.f32.mrb[0].mxu0
    %v625 = vadd.f32 %v551, %v624
    %626 = vdwg.mxu0
    %v629 = vcombine.low %v623, %v625
    %631 = vst [vmem:[#allocation2] sm:$0xff] %v629
    // Predicated region
    $region30: #{tpu_custom_call.1} parent=1 // pred_check
      _
    $region31: #{tpu_custom_call.1} parent=1 // pred_check_branch
      %633 = sbr.rel (0) target = $region33
    $region32: #{tpu_custom_call.1} parent=1 // pred_region
      %s635 = ssub.s32 128, 128
      %636 = vsyncadd [#allocation3], %s635
      %s638 = sshll.u32 [#allocation2], 4
      %s639 = int_to_ptr.vmem [resolvable:$true] %s638
      %641 = dma.vmem_to_hbm [thread:$0]  %s639, 128, %s7, [#allocation3]
    $region33: #{tpu_custom_call.1} parent=1 // pred_fallthru
      _
    // Predicated region
    $region34: #{tpu_custom_call.1} parent=1 // pred_check
      _
    $region35: #{tpu_custom_call.1} parent=1 // pred_check_branch
      %643 = sbr.rel (0) target = $region37
    $region36: #{tpu_custom_call.1} parent=1 // pred_region
      %644 = dma.done [#allocation3], 128
    $region37: #{tpu_custom_call.1} parent=1 // pred_fallthru
      _
    %645 = vsyncpa [#allocation3], 1

</llo_original>
